<compile_context>
chip_gen: v7x
topology: tpu7x:2x2x1
jax: 0.10.0
libtpu: 0.0.40
codegen_flags: <defaults>
</compile_context>

<pallas_src>
import jax
import jax.numpy as jnp
from jax.experimental import pallas as pl
from jax.experimental.pallas import tpu as pltpu

VID_IN = 3 * 16 * 16   # flattened NCHW video input (B, 3, 16, 16) -> 768
AUD_IN = 32            # flattened audio input (B, 1, 32) -> 32
VID_FEAT = 8           # video backbone output dim (implied by Linear(8 + 8, 64))
AUD_FEAT = 8           # audio backbone output dim
HIDDEN = 64
OUT_DIM = 8

# rows per grid step; bf16 video tile = 2048*768*2B = 3 MiB, 6 MiB double-
# buffered -> comfortably inside v5e's 16 MiB scoped default and v7x's 64 MiB
# physical VMEM even with audio/output buffers and VMEM-resident weights.
BATCH_TILE = 2048


def _round_up(x, m):
    return (x + m - 1) // m * m


def fused_fusion_kernel(vid_ref, aud_ref, wvh_ref, wah_ref, b1_ref, w2_ref,
                        b2_ref, o_ref):
    """h = relu(vid @ Wvh + aud @ Wah + b1);  out = h @ W2 + b2.

    Backbone projections are pre-folded into Wvh / Wah, so both matmuls feed
    the MXU accumulate path directly and there is no lane-axis concat and no
    low-lane-density (TB, 8) intermediate.
    """
    h = (jnp.dot(vid_ref[...], wvh_ref[...], preferred_element_type=jnp.float32)
         + jnp.dot(aud_ref[...], wah_ref[...], preferred_element_type=jnp.float32)
         + b1_ref[...])                                                     # (TB, 64) f32
    h = jnp.maximum(h, 0.0)                                                 # ReLU

    out = jnp.dot(h, w2_ref[...], preferred_element_type=jnp.float32) + b2_ref[...]
    # NOTE: OUT_DIM=8 (<128 lanes) -> masked vst; output traffic is ~1% of the
    # 768-wide video input DMA, so lane-padding the output is not worth it.
    o_ref[...] = out.astype(o_ref.dtype)


def simple_fusion_pallas(video_flat, audio_flat, wv, wa, w1, b1, w2, b2):
    """video_flat: (B, 768) f32, audio_flat: (B, 32) f32 -> (B, 8) f32."""
    B = video_flat.shape[0]

    # Fold frozen linear backbones into the first fusion layer (exact: ReLU is
    # after W1 and the backbones are linear).  Fold in f32, store bf16.
    wvh = (wv @ w1[:VID_FEAT]).astype(jnp.bfloat16)      # (768, 64)
    wah = (wa @ w1[VID_FEAT:]).astype(jnp.bfloat16)      # (32, 64)
    b1_2d = b1.reshape(1, HIDDEN).astype(jnp.float32)
    b2_2d = b2.reshape(1, OUT_DIM).astype(jnp.float32)
    w2_f32 = w2.astype(jnp.float32)

    # bf16 activations for the bandwidth-dominant video read (f32 accumulate).
    vid_bf16 = video_flat.astype(jnp.bfloat16)
    aud_bf16 = audio_flat.astype(jnp.bfloat16)

    # Batch tile: multiple of 16 sublanes (bf16 packing), capped at BATCH_TILE,
    # and capped at ceil(B/2) so the grid has >= 2 steps for v7x's two TCs.
    # No wrapper-side padding: the ragged final block is clipped by Pallas
    # (garbage rows only ever land in output rows >= B, which don't exist).
    if B <= 16:
        tb = B                                            # single exact block
    else:
        tb = min(BATCH_TILE, _round_up(-(-B // 2), 16))
    grid = (pl.cdiv(B, tb),)

    batch_spec = lambda feat: pl.BlockSpec((tb, feat), lambda i: (i, 0))
    const_spec = lambda shape: pl.BlockSpec(shape, lambda i: (0, 0))  # VMEM-resident

    cost = pl.CostEstimate(
        flops=2 * B * (VID_IN * HIDDEN + AUD_IN * HIDDEN + HIDDEN * OUT_DIM),
        transcendentals=0,
        bytes_accessed=(B * (VID_IN + AUD_IN) * 2          # bf16 inputs
                        + B * OUT_DIM * 4                   # f32 output
                        + (VID_IN + AUD_IN) * HIDDEN * 2    # folded weights
                        + HIDDEN * OUT_DIM * 4 + (HIDDEN + OUT_DIM) * 4),
    )

    out = pl.pallas_call(
        fused_fusion_kernel,
        out_shape=jax.ShapeDtypeStruct((B, OUT_DIM), jnp.float32),
        grid_spec=pltpu.PrefetchScalarGridSpec(
            num_scalar_prefetch=0,
            grid=grid,
            in_specs=[
                batch_spec(VID_IN),                 # video tile  (TB, 768) bf16
                batch_spec(AUD_IN),                 # audio tile  (TB, 32)  bf16
                const_spec((VID_IN, HIDDEN)),       # Wvh         (768, 64) bf16
                const_spec((AUD_IN, HIDDEN)),       # Wah         (32, 64)  bf16
                const_spec((1, HIDDEN)),            # b1          (1, 64)   f32
                const_spec((HIDDEN, OUT_DIM)),      # w2          (64, 8)   f32
                const_spec((1, OUT_DIM)),           # b2          (1, 8)    f32
            ],
            out_specs=batch_spec(OUT_DIM),          # out         (TB, 8)   f32
        ),
        compiler_params=pltpu.CompilerParams(
            dimension_semantics=("parallel",),      # shard batch tiles on v7x's 2 TCs
            vmem_limit_bytes=48 * 1024 * 1024,      # explicit; > v5e 16 MiB default,
                                                    # < v7x 64 MiB physical with headroom
        ),
        cost_estimate=cost,
    )(vid_bf16, aud_bf16, wvh, wah, b1_2d, w2_f32, b2_2d)

    return out


def make_params(key):
    """Deterministic parameter init (shapes from the module's __init__)."""
    k = jax.random.split(key, 8)
    # fusion head: Linear(16, 64), Linear(64, 8)  (weights stored input-major;
    # transpose if importing real nn.Linear weights, which are (out, in)).
    w1 = jax.random.normal(k[0], (VID_FEAT + AUD_FEAT, HIDDEN), jnp.float32) * 0.1
    b1 = jax.random.normal(k[1], (HIDDEN,), jnp.float32) * 0.1
    w2 = jax.random.normal(k[2], (HIDDEN, OUT_DIM), jnp.float32) * 0.1
    b2 = jax.random.normal(k[3], (OUT_DIM,), jnp.float32) * 0.1
    # frozen backbone stand-ins (external submodules in the original code)
    wv = jax.random.normal(k[4], (VID_IN, VID_FEAT), jnp.float32) * 0.05
    wa = jax.random.normal(k[5], (AUD_IN, AUD_FEAT), jnp.float32) * 0.05
    return w1, b1, w2, b2, wv, wa


if __name__ == "__main__":
    key = jax.random.PRNGKey(0)
    kp, kv, ka = jax.random.split(key, 3)

    B = 2
    video_input = jax.random.normal(kv, (B, 3, 16, 16), jnp.float32)   # NCHW
    audio_input = jax.random.normal(ka, (B, 1, 32), jnp.float32)

    w1, b1, w2, b2, wv, wa = make_params(kp)

    video_flat = video_input.reshape(B, -1)       # (B, 768)
    audio_flat = audio_input.reshape(B, -1)       # (B, 32)

    out = simple_fusion_pallas(video_flat, audio_flat, wv, wa, w1, b1, w2, b2)
    out = jax.block_until_ready(out)

    # reference check in plain f32 JAX (same semantics as the PyTorch forward)
    v_feat = video_flat @ wv                      # video_net stub
    a_feat = audio_flat @ wa                      # audio_net stub
    fused = jnp.concatenate([v_feat, a_feat], axis=1)
    ref = jnp.maximum(fused @ w1 + b1, 0.0) @ w2 + b2

    assert out.shape == (B, OUT_DIM)
    # tolerance covers the bf16 activation/weight cast on the K=768 contraction
    assert jnp.allclose(out, ref, atol=5e-2, rtol=5e-2), "mismatch vs reference"

    print("KERNEL_OK")
</pallas_src>

<mosaic_0001>
module attributes {stable_mosaic.version = 11 : i64} {
  func.func @fused_fusion_kernel(%arg0: i32, %arg1: memref<2x768xbf16, #tpu.memory_space<vmem>>, %arg2: memref<2x32xbf16, #tpu.memory_space<vmem>>, %arg3: memref<768x64xbf16, #tpu.memory_space<vmem>>, %arg4: memref<32x64xbf16, #tpu.memory_space<vmem>>, %arg5: memref<1x64xf32, #tpu.memory_space<vmem>>, %arg6: memref<64x8xf32, #tpu.memory_space<vmem>>, %arg7: memref<1x8xf32, #tpu.memory_space<vmem>>, %arg8: memref<2x8xf32, #tpu.memory_space<vmem>>) attributes {dimension_semantics = [#tpu.dimension_semantics<parallel>], iteration_bounds = array<i64: 1>, scalar_prefetch = 0 : i64, scratch_operands = 0 : i64, tpu.core_type = #tpu.core_type<tc>, window_params = [{transform_indices = @transform_0, window_bounds = array<i64: 2, 768>}, {transform_indices = @transform_1, window_bounds = array<i64: 2, 32>}, {pipeline_mode = #tpu.pipeline_mode<synchronous>, transform_indices = @transform_2, window_bounds = array<i64: 768, 64>}, {pipeline_mode = #tpu.pipeline_mode<synchronous>, transform_indices = @transform_3, window_bounds = array<i64: 32, 64>}, {pipeline_mode = #tpu.pipeline_mode<synchronous>, transform_indices = @transform_4, window_bounds = array<i64: 1, 64>}, {pipeline_mode = #tpu.pipeline_mode<synchronous>, transform_indices = @transform_5, window_bounds = array<i64: 64, 8>}, {pipeline_mode = #tpu.pipeline_mode<synchronous>, transform_indices = @transform_6, window_bounds = array<i64: 1, 8>}, {transform_indices = @transform_7, window_bounds = array<i64: 2, 8>}]} {
    %c0 = arith.constant 0 : index
    %c0_0 = arith.constant 0 : index
    %0 = vector.load %arg1[%c0, %c0_0] : memref<2x768xbf16, #tpu.memory_space<vmem>>, vector<2x768xbf16>
    %c0_1 = arith.constant 0 : index
    %c0_2 = arith.constant 0 : index
    %1 = vector.load %arg3[%c0_1, %c0_2] : memref<768x64xbf16, #tpu.memory_space<vmem>>, vector<768x64xbf16>
    %cst = arith.constant dense<0.000000e+00> : vector<2x64xf32>
    %2 = tpu.matmul %0, %1, %cst {dimension_numbers = #tpu.dot_dimension_numbers<[1], [0], [0], [1], [0, 0, 1, 1], [], []>} : vector<2x768xbf16>, vector<768x64xbf16>, vector<2x64xf32> -> vector<2x64xf32>
    %c0_3 = arith.constant 0 : index
    %c0_4 = arith.constant 0 : index
    %3 = vector.load %arg2[%c0_3, %c0_4] : memref<2x32xbf16, #tpu.memory_space<vmem>>, vector<2x32xbf16>
    %c0_5 = arith.constant 0 : index
    %c0_6 = arith.constant 0 : index
    %4 = vector.load %arg4[%c0_5, %c0_6] : memref<32x64xbf16, #tpu.memory_space<vmem>>, vector<32x64xbf16>
    %cst_7 = arith.constant dense<0.000000e+00> : vector<2x64xf32>
    %5 = tpu.matmul %3, %4, %cst_7 {dimension_numbers = #tpu.dot_dimension_numbers<[1], [0], [0], [1], [0, 0, 1, 1], [], []>} : vector<2x32xbf16>, vector<32x64xbf16>, vector<2x64xf32> -> vector<2x64xf32>
    %6 = arith.addf %2, %5 : vector<2x64xf32>
    %c0_8 = arith.constant 0 : index
    %c0_9 = arith.constant 0 : index
    %7 = vector.load %arg5[%c0_8, %c0_9] : memref<1x64xf32, #tpu.memory_space<vmem>>, vector<1x64xf32>
    %8 = vector.broadcast %7 : vector<1x64xf32> to vector<2x64xf32>
    %9 = arith.addf %6, %8 : vector<2x64xf32>
    %cst_10 = arith.constant 0.000000e+00 : f32
    %10 = vector.broadcast %cst_10 : f32 to vector<2x64xf32>
    %11 = arith.maximumf %9, %10 : vector<2x64xf32>
    %c0_11 = arith.constant 0 : index
    %c0_12 = arith.constant 0 : index
    %12 = vector.load %arg6[%c0_11, %c0_12] : memref<64x8xf32, #tpu.memory_space<vmem>>, vector<64x8xf32>
    %cst_13 = arith.constant dense<0.000000e+00> : vector<2x8xf32>
    %13 = tpu.matmul %11, %12, %cst_13 {dimension_numbers = #tpu.dot_dimension_numbers<[1], [0], [0], [1], [0, 0, 1, 1], [], []>} : vector<2x64xf32>, vector<64x8xf32>, vector<2x8xf32> -> vector<2x8xf32>
    %c0_14 = arith.constant 0 : index
    %c0_15 = arith.constant 0 : index
    %14 = vector.load %arg7[%c0_14, %c0_15] : memref<1x8xf32, #tpu.memory_space<vmem>>, vector<1x8xf32>
    %15 = vector.broadcast %14 : vector<1x8xf32> to vector<2x8xf32>
    %16 = arith.addf %13, %15 : vector<2x8xf32>
    %c0_16 = arith.constant 0 : index
    %c0_17 = arith.constant 0 : index
    %17 = vector.load %arg8[%c0_16, %c0_17] : memref<2x8xf32, #tpu.memory_space<vmem>>, vector<2x8xf32>
    tpu.vector_store %arg8[%c0_16, %c0_17], %16 {strides = array<i32>} : memref<2x8xf32, #tpu.memory_space<vmem>>, vector<2x8xf32>,
    return
  }
  func.func @transform_0(%arg0: i32) -> (i32, i32) {
    %c0_i32 = arith.constant 0 : i32
    %c0_i32_0 = arith.constant 0 : i32
    return %arg0, %c0_i32 : i32, i32
  }
  func.func @transform_1(%arg0: i32) -> (i32, i32) {
    %c0_i32 = arith.constant 0 : i32
    %c0_i32_0 = arith.constant 0 : i32
    return %arg0, %c0_i32 : i32, i32
  }
  func.func @transform_2(%arg0: i32) -> (i32, i32) {
    %c0_i32 = arith.constant 0 : i32
    %c0_i32_0 = arith.constant 0 : i32
    %c0_i32_1 = arith.constant 0 : i32
    return %c0_i32, %c0_i32_0 : i32, i32
  }
  func.func @transform_3(%arg0: i32) -> (i32, i32) {
    %c0_i32 = arith.constant 0 : i32
    %c0_i32_0 = arith.constant 0 : i32
    %c0_i32_1 = arith.constant 0 : i32
    return %c0_i32, %c0_i32_0 : i32, i32
  }
  func.func @transform_4(%arg0: i32) -> (i32, i32) {
    %c0_i32 = arith.constant 0 : i32
    %c0_i32_0 = arith.constant 0 : i32
    %c0_i32_1 = arith.constant 0 : i32
    return %c0_i32, %c0_i32_0 : i32, i32
  }
  func.func @transform_5(%arg0: i32) -> (i32, i32) {
    %c0_i32 = arith.constant 0 : i32
    %c0_i32_0 = arith.constant 0 : i32
    %c0_i32_1 = arith.constant 0 : i32
    return %c0_i32, %c0_i32_0 : i32, i32
  }
  func.func @transform_6(%arg0: i32) -> (i32, i32) {
    %c0_i32 = arith.constant 0 : i32
    %c0_i32_0 = arith.constant 0 : i32
    %c0_i32_1 = arith.constant 0 : i32
    return %c0_i32, %c0_i32_0 : i32, i32
  }
  func.func @transform_7(%arg0: i32) -> (i32, i32) {
    %c0_i32 = arith.constant 0 : i32
    %c0_i32_0 = arith.constant 0 : i32
    return %arg0, %c0_i32 : i32, i32
  }
}

</mosaic_0001>

<llo_original>
// kernel: tpu_custom_call.1
$region0: #{tpu_custom_call.1}
  #allocation0 [shape = 'u32[]', space=smem, size = 0x4, offset = 0x4, fixed_abs, tag = 'smem constant byte address 0x4 - core index']
  #allocation1 [shape = 'u32[144,128]{1,0:T(1,128)}', space=vmem, size = 0x12000, scoped, tag = 'internal scratch']
  %s0 = inlined_call_operand.vmem [shape: bf16[2,768], index: 0, kind: input, shape index: {}]
  %s1 = inlined_call_operand.vmem [shape: bf16[2,32], index: 1, kind: input, shape index: {}]
  %s2 = inlined_call_operand.vmem [shape: bf16[768,64], index: 2, kind: input, shape index: {}]
  %s3 = inlined_call_operand.vmem [shape: bf16[32,64], index: 3, kind: input, shape index: {}]
  %s4 = inlined_call_operand.vmem [shape: f32[1,64], index: 4, kind: input, shape index: {}]
  %s5 = inlined_call_operand.vmem [shape: f32[64,8], index: 5, kind: input, shape index: {}]
  %s6 = inlined_call_operand.vmem [shape: f32[1,8], index: 6, kind: input, shape index: {}]
  %s7 = inlined_call_operand.hbm [shape: f32[2,8], index: 7, kind: output, shape index: {}]
  %s8 = sld [smem:[#allocation0]]
  $region38: #{tpu_custom_call.1} parent=0
    _
  %s10 = ssub.s32 1, %s8
  %s11 = scalar_select 0, %s10, %s8
  $region1: #{tpu_custom_call.1} parent=0
    #allocation2 [shape = 'u8[1024]{0}', space=vmem, size = 0x400, scoped, tag = 'output window, operand 0, single buffered']
    #allocation3 [shape = 's32[1]{0}', space=sflag, size = 0x4, scoped, tag = 'scoped memory for tpu_custom_call.1']
    %12 = vsyncpa [#allocation3], 0
    // Predicated region
    $region2: #{tpu_custom_call.1} parent=1 // pred_check
      _
    $region3: #{tpu_custom_call.1} parent=1 // pred_check_branch
      %14 = sbr.rel (0) target = $region5
    $region4: #{tpu_custom_call.1} parent=1 // pred_region
      _
    $region5: #{tpu_custom_call.1} parent=1 // pred_fallthru
      _
    // Predicated region
    $region6: #{tpu_custom_call.1} parent=1 // pred_check
      _
    $region7: #{tpu_custom_call.1} parent=1 // pred_check_branch
      %16 = sbr.rel (0) target = $region9
    $region8: #{tpu_custom_call.1} parent=1 // pred_region
      _
    $region9: #{tpu_custom_call.1} parent=1 // pred_fallthru
      _
    // Predicated region
    $region10: #{tpu_custom_call.1} parent=1 // pred_check
      _
    $region11: #{tpu_custom_call.1} parent=1 // pred_check_branch
      %18 = sbr.rel (0) target = $region13
    $region12: #{tpu_custom_call.1} parent=1 // pred_region
      _
    $region13: #{tpu_custom_call.1} parent=1 // pred_fallthru
      _
    // Predicated region
    $region14: #{tpu_custom_call.1} parent=1 // pred_check
      _
    $region15: #{tpu_custom_call.1} parent=1 // pred_check_branch
      %20 = sbr.rel (0) target = $region17
    $region16: #{tpu_custom_call.1} parent=1 // pred_region
      _
    $region17: #{tpu_custom_call.1} parent=1 // pred_fallthru
      _
    // Predicated region
    $region18: #{tpu_custom_call.1} parent=1 // pred_check
      _
    $region19: #{tpu_custom_call.1} parent=1 // pred_check_branch
      %22 = sbr.rel (0) target = $region21
    $region20: #{tpu_custom_call.1} parent=1 // pred_region
      _
    $region21: #{tpu_custom_call.1} parent=1 // pred_fallthru
      _
    // Predicated region
    $region22: #{tpu_custom_call.1} parent=1 // pred_check
      _
    $region23: #{tpu_custom_call.1} parent=1 // pred_check_branch
      %24 = sbr.rel (0) target = $region25
    $region24: #{tpu_custom_call.1} parent=1 // pred_region
      _
    $region25: #{tpu_custom_call.1} parent=1 // pred_fallthru
      _
    // Predicated region
    $region26: #{tpu_custom_call.1} parent=1 // pred_check
      _
    $region27: #{tpu_custom_call.1} parent=1 // pred_check_branch
      %26 = sbr.rel (0) target = $region29
    $region28: #{tpu_custom_call.1} parent=1 // pred_region
      _
    $region29: #{tpu_custom_call.1} parent=1 // pred_fallthru
      _
    %v28 = vld [vmem:[%s0] sm:$0x3f]
    %v29 = vld [vmem:[%s2] sm:$0xf]
    %v30 = vld [vmem:[%s2 + $0x4] sm:$0xf]
    %v31 = vld [vmem:[%s2 + $0x8] sm:$0xf]
    %v32 = vld [vmem:[%s2 + $0xc] sm:$0xf]
    %v33 = vld [vmem:[%s2 + $0x10] sm:$0xf]
    %v34 = vld [vmem:[%s2 + $0x14] sm:$0xf]
    %v35 = vld [vmem:[%s2 + $0x18] sm:$0xf]
    %v36 = vld [vmem:[%s2 + $0x1c] sm:$0xf]
    %v37 = vld [vmem:[%s2 + $0x20] sm:$0xf]
    %v38 = vld [vmem:[%s2 + $0x24] sm:$0xf]
    %v39 = vld [vmem:[%s2 + $0x28] sm:$0xf]
    %v40 = vld [vmem:[%s2 + $0x2c] sm:$0xf]
    %v41 = vld [vmem:[%s2 + $0x30] sm:$0xf]
    %v42 = vld [vmem:[%s2 + $0x34] sm:$0xf]
    %v43 = vld [vmem:[%s2 + $0x38] sm:$0xf]
    %v44 = vld [vmem:[%s2 + $0x3c] sm:$0xf]
    %v45 = vld [vmem:[%s2 + $0x40] sm:$0xf]
    %v46 = vld [vmem:[%s2 + $0x44] sm:$0xf]
    %v47 = vld [vmem:[%s2 + $0x48] sm:$0xf]
    %v48 = vld [vmem:[%s2 + $0x4c] sm:$0xf]
    %v49 = vld [vmem:[%s2 + $0x50] sm:$0xf]
    %v50 = vld [vmem:[%s2 + $0x54] sm:$0xf]
    %v51 = vld [vmem:[%s2 + $0x58] sm:$0xf]
    %v52 = vld [vmem:[%s2 + $0x5c] sm:$0xf]
    %v53 = vld [vmem:[%s2 + $0x60] sm:$0xf]
    %v54 = vld [vmem:[%s2 + $0x64] sm:$0xf]
    %v55 = vld [vmem:[%s2 + $0x68] sm:$0xf]
    %v56 = vld [vmem:[%s2 + $0x6c] sm:$0xf]
    %v57 = vld [vmem:[%s2 + $0x70] sm:$0xf]
    %v58 = vld [vmem:[%s2 + $0x74] sm:$0xf]
    %v59 = vld [vmem:[%s2 + $0x78] sm:$0xf]
    %v60 = vld [vmem:[%s2 + $0x7c] sm:$0xf]
    %v61 = vld [vmem:[%s2 + $0x80] sm:$0xf]
    %v62 = vld [vmem:[%s2 + $0x84] sm:$0xf]
    %v63 = vld [vmem:[%s2 + $0x88] sm:$0xf]
    %v64 = vld [vmem:[%s2 + $0x8c] sm:$0xf]
    %v65 = vld [vmem:[%s2 + $0x90] sm:$0xf]
    %v66 = vld [vmem:[%s2 + $0x94] sm:$0xf]
    %v67 = vld [vmem:[%s2 + $0x98] sm:$0xf]
    %v68 = vld [vmem:[%s2 + $0x9c] sm:$0xf]
    %v69 = vld [vmem:[%s2 + $0xa0] sm:$0xf]
    %v70 = vld [vmem:[%s2 + $0xa4] sm:$0xf]
    %v71 = vld [vmem:[%s2 + $0xa8] sm:$0xf]
    %v72 = vld [vmem:[%s2 + $0xac] sm:$0xf]
    %v73 = vld [vmem:[%s2 + $0xb0] sm:$0xf]
    %v74 = vld [vmem:[%s2 + $0xb4] sm:$0xf]
    %v75 = vld [vmem:[%s2 + $0xb8] sm:$0xf]
    %v76 = vld [vmem:[%s2 + $0xbc] sm:$0xf]
    %v77 = vld [vmem:[%s2 + $0xc0] sm:$0xf]
    %v78 = vld [vmem:[%s2 + $0xc4] sm:$0xf]
    %v79 = vld [vmem:[%s2 + $0xc8] sm:$0xf]
    %v80 = vld [vmem:[%s2 + $0xcc] sm:$0xf]
    %v81 = vld [vmem:[%s2 + $0xd0] sm:$0xf]
    %v82 = vld [vmem:[%s2 + $0xd4] sm:$0xf]
    %v83 = vld [vmem:[%s2 + $0xd8] sm:$0xf]
    %v84 = vld [vmem:[%s2 + $0xdc] sm:$0xf]
    %v85 = vld [vmem:[%s2 + $0xe0] sm:$0xf]
    %v86 = vld [vmem:[%s2 + $0xe4] sm:$0xf]
    %v87 = vld [vmem:[%s2 + $0xe8] sm:$0xf]
    %v88 = vld [vmem:[%s2 + $0xec] sm:$0xf]
    %v89 = vld [vmem:[%s2 + $0xf0] sm:$0xf]
    %v90 = vld [vmem:[%s2 + $0xf4] sm:$0xf]
    %v91 = vld [vmem:[%s2 + $0xf8] sm:$0xf]
    %v92 = vld [vmem:[%s2 + $0xfc] sm:$0xf]
    %v93 = vld [vmem:[%s2 + $0x100] sm:$0xf]
    %v94 = vld [vmem:[%s2 + $0x104] sm:$0xf]
    %v95 = vld [vmem:[%s2 + $0x108] sm:$0xf]
    %v96 = vld [vmem:[%s2 + $0x10c] sm:$0xf]
    %v97 = vld [vmem:[%s2 + $0x110] sm:$0xf]
    %v98 = vld [vmem:[%s2 + $0x114] sm:$0xf]
    %v99 = vld [vmem:[%s2 + $0x118] sm:$0xf]
    %v100 = vld [vmem:[%s2 + $0x11c] sm:$0xf]
    %v101 = vld [vmem:[%s2 + $0x120] sm:$0xf]
    %v102 = vld [vmem:[%s2 + $0x124] sm:$0xf]
    %v103 = vld [vmem:[%s2 + $0x128] sm:$0xf]
    %v104 = vld [vmem:[%s2 + $0x12c] sm:$0xf]
    %v105 = vld [vmem:[%s2 + $0x130] sm:$0xf]
    %v106 = vld [vmem:[%s2 + $0x134] sm:$0xf]
    %v107 = vld [vmem:[%s2 + $0x138] sm:$0xf]
    %v108 = vld [vmem:[%s2 + $0x13c] sm:$0xf]
    %v109 = vld [vmem:[%s2 + $0x140] sm:$0xf]
    %v110 = vld [vmem:[%s2 + $0x144] sm:$0xf]
    %v111 = vld [vmem:[%s2 + $0x148] sm:$0xf]
    %v112 = vld [vmem:[%s2 + $0x14c] sm:$0xf]
    %v113 = vld [vmem:[%s2 + $0x150] sm:$0xf]
    %v114 = vld [vmem:[%s2 + $0x154] sm:$0xf]
    %v115 = vld [vmem:[%s2 + $0x158] sm:$0xf]
    %v116 = vld [vmem:[%s2 + $0x15c] sm:$0xf]
    %v117 = vld [vmem:[%s2 + $0x160] sm:$0xf]
    %v118 = vld [vmem:[%s2 + $0x164] sm:$0xf]
    %v119 = vld [vmem:[%s2 + $0x168] sm:$0xf]
    %v120 = vld [vmem:[%s2 + $0x16c] sm:$0xf]
    %v121 = vld [vmem:[%s2 + $0x170] sm:$0xf]
    %v122 = vld [vmem:[%s2 + $0x174] sm:$0xf]
    %v123 = vld [vmem:[%s2 + $0x178] sm:$0xf]
    %v124 = vld [vmem:[%s2 + $0x17c] sm:$0xf]
    %v125 = vld [vmem:[%s1] sm:$0x1]
    %v126 = vld [vmem:[%s3] sm:$0xf]
    %v127 = vld [vmem:[%s3 + $0x4] sm:$0xf]
    %v128 = vld [vmem:[%s3 + $0x8] sm:$0xf]
    %v129 = vld [vmem:[%s3 + $0xc] sm:$0xf]
    %v134 = vunpack.c.l.b16 %v126
    %v135 = vunpack.c.l.b16 %v127
    %v136 = vunpack.c.l.b16 %v128
    %v137 = vunpack.c.l.b16 %v129
    %v138 = vpack.c.b16 %v135, %v134
    %v139 = vpack.c.b16 %v137, %v136
    %vm142 = vcmask 261120
    %v144 = vsel %vm142, %v125, 0
    %146 = vmatprep.subr.bf16.mxu0 0
    %147 = vmatpush1.bf16.msra.mxu0 %v138
    %148 = vmatprep.subr.bf16.mxu0 0
    %149 = vmatpush1.bf16.msra.mxu0 %v139
    %150 = vmatprep.subr.bf16.mxu0 0
    %151 = vmatpush1.bf16.msra.mxu0 0
    %152 = vmatprep.subr.bf16.mxu0 0
    %153 = vmatpush1.bf16.msra.mxu0 0
    %154 = vmatprep.subr.bf16.mxu0 0
    %155 = vmatpush1.bf16.msra.mxu0 0
    %156 = vmatprep.subr.bf16.mxu0 0
    %157 = vmatpush1.bf16.msra.mxu0 0
    %158 = vmatprep.subr.bf16.mxu0 0
    %159 = vmatpush1.bf16.msra.mxu0 0
    %160 = vmatprep.subr.bf16.mxu0 0
    %161 = vmatpush1.bf16.msra.mxu0 0
    %162 = vmatprep.subr.bf16.mxu0 0
    %163 = vmatpush1.bf16.msra.mxu0 0
    %164 = vmatprep.subr.bf16.mxu0 0
    %165 = vmatpush1.bf16.msra.mxu0 0
    %166 = vmatprep.subr.bf16.mxu0 0
    %167 = vmatpush1.bf16.msra.mxu0 0
    %168 = vmatprep.subr.bf16.mxu0 0
    %169 = vmatpush1.bf16.msra.mxu0 0
    %170 = vmatprep.subr.bf16.mxu0 0
    %171 = vmatpush1.bf16.msra.mxu0 0
    %172 = vmatprep.subr.bf16.mxu0 0
    %173 = vmatpush1.bf16.msra.mxu0 0
    %174 = vmatprep.subr.bf16.mxu0 0
    %175 = vmatpush1.bf16.msra.mxu0 0
    %176 = vmatprep.subr.bf16.mxu0 0
    %177 = vmatpush1.bf16.msra.mxu0 0
    %178 = vmatprep.mubr.bf16.mxu0 0
    %179 = vmatmul.mubr.bf16.gmra.mrb[0].mxu0 %v144
    %v180 = vpop.f32.mrb[0].mxu0
    %v181 = vadd.f32 0.0, %v180
    %v182 = vpop.f32.mrb[0].mxu0
    %v183 = vpop.f32.mrb[0].mxu0
    %v184 = vpop.f32.mrb[0].mxu0
    %185 = vdwg.mxu0
    %v187 = vcombine.high %v28, %v28
    %v189 = vunpack.c.l.s4 1966171168
    %v190 = vunpack.c.0.s8 %v189
    %v191 = vlaneseq
    %v192 = vshrl.u32 %v191, 7
    %v193 = vsub.s32 %v190, %v192
    %v194 = vrot.slane %v28, %v193
    %v196 = vunpack.c.l.s4 1966171168
    %v197 = vunpack.c.0.s8 %v196
    %v198 = vlaneseq
    %v199 = vshrl.u32 %v198, 7
    %v200 = vsub.s32 %v197, %v199
    %v201 = vrot.slane %v187, %v200
    %v202 = vcombine.high %v194, %v194
    %v203 = vcombine.high %v201, %v201
    %v205 = vunpack.c.l.s4 1966171168
    %v206 = vunpack.c.0.s8 %v205
    %v207 = vlaneseq
    %v208 = vshrl.u32 %v207, 7
    %v209 = vsub.s32 %v206, %v208
    %v210 = vrot.slane %v194, %v209
    %v212 = vunpack.c.l.s4 1966171168
    %v213 = vunpack.c.0.s8 %v212
    %v214 = vlaneseq
    %v215 = vshrl.u32 %v214, 7
    %v216 = vsub.s32 %v213, %v215
    %v217 = vrot.slane %v201, %v216
    %v219 = vunpack.c.l.s4 1966171168
    %v220 = vunpack.c.0.s8 %v219
    %v221 = vlaneseq
    %v222 = vshrl.u32 %v221, 7
    %v223 = vsub.s32 %v220, %v222
    %v224 = vrot.slane %v202, %v223
    %v226 = vunpack.c.l.s4 1966171168
    %v227 = vunpack.c.0.s8 %v226
    %v228 = vlaneseq
    %v229 = vshrl.u32 %v228, 7
    %v230 = vsub.s32 %v227, %v229
    %v231 = vrot.slane %v203, %v230
    %v232 = vcombine.high %v210, %v210
    %v233 = vcombine.high %v224, %v224
    %v336 = vunpack.c.l.b16 %v29
    %v337 = vunpack.c.l.b16 %v30
    %v338 = vunpack.c.l.b16 %v31
    %v339 = vunpack.c.l.b16 %v32
    %v340 = vunpack.c.l.b16 %v33
    %v341 = vunpack.c.l.b16 %v34
    %v342 = vunpack.c.l.b16 %v35
    %v343 = vunpack.c.l.b16 %v36
    %v344 = vunpack.c.l.b16 %v37
    %v345 = vunpack.c.l.b16 %v38
    %v346 = vunpack.c.l.b16 %v39
    %v347 = vunpack.c.l.b16 %v40
    %v348 = vunpack.c.l.b16 %v41
    %v349 = vunpack.c.l.b16 %v42
    %v350 = vunpack.c.l.b16 %v43
    %v351 = vunpack.c.l.b16 %v44
    %v352 = vunpack.c.l.b16 %v45
    %v353 = vunpack.c.l.b16 %v46
    %v354 = vunpack.c.l.b16 %v47
    %v355 = vunpack.c.l.b16 %v48
    %v356 = vunpack.c.l.b16 %v49
    %v357 = vunpack.c.l.b16 %v50
    %v358 = vunpack.c.l.b16 %v51
    %v359 = vunpack.c.l.b16 %v52
    %v360 = vunpack.c.l.b16 %v53
    %v361 = vunpack.c.l.b16 %v54
    %v362 = vunpack.c.l.b16 %v55
    %v363 = vunpack.c.l.b16 %v56
    %v364 = vunpack.c.l.b16 %v57
    %v365 = vunpack.c.l.b16 %v58
    %v366 = vunpack.c.l.b16 %v59
    %v367 = vunpack.c.l.b16 %v60
    %v368 = vunpack.c.l.b16 %v61
    %v369 = vunpack.c.l.b16 %v62
    %v370 = vunpack.c.l.b16 %v63
    %v371 = vunpack.c.l.b16 %v64
    %v372 = vunpack.c.l.b16 %v65
    %v373 = vunpack.c.l.b16 %v66
    %v374 = vunpack.c.l.b16 %v67
    %v375 = vunpack.c.l.b16 %v68
    %v376 = vunpack.c.l.b16 %v69
    %v377 = vunpack.c.l.b16 %v70
    %v378 = vunpack.c.l.b16 %v71
    %v379 = vunpack.c.l.b16 %v72
    %v380 = vunpack.c.l.b16 %v73
    %v381 = vunpack.c.l.b16 %v74
    %v382 = vunpack.c.l.b16 %v75
    %v383 = vunpack.c.l.b16 %v76
    %v384 = vunpack.c.l.b16 %v77
    %v385 = vunpack.c.l.b16 %v78
    %v386 = vunpack.c.l.b16 %v79
    %v387 = vunpack.c.l.b16 %v80
    %v388 = vunpack.c.l.b16 %v81
    %v389 = vunpack.c.l.b16 %v82
    %v390 = vunpack.c.l.b16 %v83
    %v391 = vunpack.c.l.b16 %v84
    %v392 = vunpack.c.l.b16 %v85
    %v393 = vunpack.c.l.b16 %v86
    %v394 = vunpack.c.l.b16 %v87
    %v395 = vunpack.c.l.b16 %v88
    %v396 = vunpack.c.l.b16 %v89
    %v397 = vunpack.c.l.b16 %v90
    %v398 = vunpack.c.l.b16 %v91
    %v399 = vunpack.c.l.b16 %v92
    %v400 = vunpack.c.l.b16 %v93
    %v401 = vunpack.c.l.b16 %v94
    %v402 = vunpack.c.l.b16 %v95
    %v403 = vunpack.c.l.b16 %v96
    %v404 = vunpack.c.l.b16 %v97
    %v405 = vunpack.c.l.b16 %v98
    %v406 = vunpack.c.l.b16 %v99
    %v407 = vunpack.c.l.b16 %v100
    %v408 = vunpack.c.l.b16 %v101
    %v409 = vunpack.c.l.b16 %v102
    %v410 = vunpack.c.l.b16 %v103
    %v411 = vunpack.c.l.b16 %v104
    %v412 = vunpack.c.l.b16 %v105
    %v413 = vunpack.c.l.b16 %v106
    %v414 = vunpack.c.l.b16 %v107
    %v415 = vunpack.c.l.b16 %v108
    %v416 = vunpack.c.l.b16 %v109
    %v417 = vunpack.c.l.b16 %v110
    %v418 = vunpack.c.l.b16 %v111
    %v419 = vunpack.c.l.b16 %v112
    %v420 = vunpack.c.l.b16 %v113
    %v421 = vunpack.c.l.b16 %v114
    %v422 = vunpack.c.l.b16 %v115
    %v423 = vunpack.c.l.b16 %v116
    %v424 = vunpack.c.l.b16 %v117
    %v425 = vunpack.c.l.b16 %v118
    %v426 = vunpack.c.l.b16 %v119
    %v427 = vunpack.c.l.b16 %v120
    %v428 = vunpack.c.l.b16 %v121
    %v429 = vunpack.c.l.b16 %v122
    %v430 = vunpack.c.l.b16 %v123
    %v431 = vunpack.c.l.b16 %v124
    %v432 = vpack.c.b16 %v337, %v336
    %v433 = vpack.c.b16 %v339, %v338
    %v434 = vpack.c.b16 %v341, %v340
    %v435 = vpack.c.b16 %v343, %v342
    %v436 = vpack.c.b16 %v345, %v344
    %v437 = vpack.c.b16 %v347, %v346
    %v438 = vpack.c.b16 %v349, %v348
    %v439 = vpack.c.b16 %v351, %v350
    %v440 = vpack.c.b16 %v353, %v352
    %v441 = vpack.c.b16 %v355, %v354
    %v442 = vpack.c.b16 %v357, %v356
    %v443 = vpack.c.b16 %v359, %v358
    %v444 = vpack.c.b16 %v361, %v360
    %v445 = vpack.c.b16 %v363, %v362
    %v446 = vpack.c.b16 %v365, %v364
    %v447 = vpack.c.b16 %v367, %v366
    %v448 = vpack.c.b16 %v369, %v368
    %v449 = vpack.c.b16 %v371, %v370
    %v450 = vpack.c.b16 %v373, %v372
    %v451 = vpack.c.b16 %v375, %v374
    %v452 = vpack.c.b16 %v377, %v376
    %v453 = vpack.c.b16 %v379, %v378
    %v454 = vpack.c.b16 %v381, %v380
    %v455 = vpack.c.b16 %v383, %v382
    %v456 = vpack.c.b16 %v385, %v384
    %v457 = vpack.c.b16 %v387, %v386
    %v458 = vpack.c.b16 %v389, %v388
    %v459 = vpack.c.b16 %v391, %v390
    %v460 = vpack.c.b16 %v393, %v392
    %v461 = vpack.c.b16 %v395, %v394
    %v462 = vpack.c.b16 %v397, %v396
    %v463 = vpack.c.b16 %v399, %v398
    %v464 = vpack.c.b16 %v401, %v400
    %v465 = vpack.c.b16 %v403, %v402
    %v466 = vpack.c.b16 %v405, %v404
    %v467 = vpack.c.b16 %v407, %v406
    %v468 = vpack.c.b16 %v409, %v408
    %v469 = vpack.c.b16 %v411, %v410
    %v470 = vpack.c.b16 %v413, %v412
    %v471 = vpack.c.b16 %v415, %v414
    %v472 = vpack.c.b16 %v417, %v416
    %v473 = vpack.c.b16 %v419, %v418
    %v474 = vpack.c.b16 %v421, %v420
    %v475 = vpack.c.b16 %v423, %v422
    %v476 = vpack.c.b16 %v425, %v424
    %v477 = vpack.c.b16 %v427, %v426
    %v478 = vpack.c.b16 %v429, %v428
    %v479 = vpack.c.b16 %v431, %v430
    %528 = vmatprep.subr.bf16.mxu0 0
    %529 = vmatpush1.bf16.msra.mxu0 %v432
    %530 = vmatprep.subr.bf16.mxu0 0
    %531 = vmatpush1.bf16.msra.mxu0 %v433
    %532 = vmatprep.subr.bf16.mxu0 0
    %533 = vmatpush1.bf16.msra.mxu0 %v434
    %534 = vmatprep.subr.bf16.mxu0 0
    %535 = vmatpush1.bf16.msra.mxu0 %v435
    %536 = vmatprep.subr.bf16.mxu0 0
    %537 = vmatpush1.bf16.msra.mxu0 %v436
    %538 = vmatprep.subr.bf16.mxu0 0
    %539 = vmatpush1.bf16.msra.mxu0 %v437
    %540 = vmatprep.subr.bf16.mxu0 0
    %541 = vmatpush1.bf16.msra.mxu0 %v438
    %542 = vmatprep.subr.bf16.mxu0 0
    %543 = vmatpush1.bf16.msra.mxu0 %v439
    %544 = vmatprep.subr.bf16.mxu0 0
    %545 = vmatpush1.bf16.msra.mxu0 %v440
    %546 = vmatprep.subr.bf16.mxu0 0
    %547 = vmatpush1.bf16.msra.mxu0 %v441
    %548 = vmatprep.subr.bf16.mxu0 0
    %549 = vmatpush1.bf16.msra.mxu0 %v442
    %550 = vmatprep.subr.bf16.mxu0 0
    %551 = vmatpush1.bf16.msra.mxu0 %v443
    %552 = vmatprep.subr.bf16.mxu0 0
    %553 = vmatpush1.bf16.msra.mxu0 %v444
    %554 = vmatprep.subr.bf16.mxu0 0
    %555 = vmatpush1.bf16.msra.mxu0 %v445
    %556 = vmatprep.subr.bf16.mxu0 0
    %557 = vmatpush1.bf16.msra.mxu0 %v446
    %558 = vmatprep.subr.bf16.mxu0 0
    %559 = vmatpush1.bf16.msra.mxu0 %v447
    %560 = vmatprep.mubr.bf16.mxu0 %v224
    %561 = vmatmul.mubr.bf16.gmra.mrb[0].mxu0 %v210
    %v562 = vpop.f32.mrb[0].mxu0
    %v563 = vadd.f32 %v181, %v562
    %v564 = vpop.f32.mrb[0].mxu0
    %v565 = vpop.f32.mrb[0].mxu0
    %v566 = vpop.f32.mrb[0].mxu0
    %567 = vdwg.mxu0
    %568 = vmatprep.subr.bf16.mxu0 0
    %569 = vmatpush1.bf16.msra.mxu0 %v448
    %570 = vmatprep.subr.bf16.mxu0 0
    %571 = vmatpush1.bf16.msra.mxu0 %v449
    %572 = vmatprep.subr.bf16.mxu0 0
    %573 = vmatpush1.bf16.msra.mxu0 %v450
    %574 = vmatprep.subr.bf16.mxu0 0
    %575 = vmatpush1.bf16.msra.mxu0 %v451
    %576 = vmatprep.subr.bf16.mxu0 0
    %577 = vmatpush1.bf16.msra.mxu0 %v452
    %578 = vmatprep.subr.bf16.mxu0 0
    %579 = vmatpush1.bf16.msra.mxu0 %v453
    %580 = vmatprep.subr.bf16.mxu0 0
    %581 = vmatpush1.bf16.msra.mxu0 %v454
    %582 = vmatprep.subr.bf16.mxu0 0
    %583 = vmatpush1.bf16.msra.mxu0 %v455
    %584 = vmatprep.subr.bf16.mxu0 0
    %585 = vmatpush1.bf16.msra.mxu0 %v456
    %586 = vmatprep.subr.bf16.mxu0 0
    %587 = vmatpush1.bf16.msra.mxu0 %v457
    %588 = vmatprep.subr.bf16.mxu0 0
    %589 = vmatpush1.bf16.msra.mxu0 %v458
    %590 = vmatprep.subr.bf16.mxu0 0
    %591 = vmatpush1.bf16.msra.mxu0 %v459
    %592 = vmatprep.subr.bf16.mxu0 0
    %593 = vmatpush1.bf16.msra.mxu0 %v460
    %594 = vmatprep.subr.bf16.mxu0 0
    %595 = vmatpush1.bf16.msra.mxu0 %v461
    %596 = vmatprep.subr.bf16.mxu0 0
    %597 = vmatpush1.bf16.msra.mxu0 %v462
    %598 = vmatprep.subr.bf16.mxu0 0
    %599 = vmatpush1.bf16.msra.mxu0 %v463
    %600 = vmatprep.mubr.bf16.mxu0 %v233
    %601 = vmatmul.mubr.bf16.gmra.mrb[0].mxu0 %v232
    %v602 = vpop.f32.mrb[0].mxu0
    %v603 = vadd.f32 %v563, %v602
    %v604 = vpop.f32.mrb[0].mxu0
    %v605 = vpop.f32.mrb[0].mxu0
    %v606 = vpop.f32.mrb[0].mxu0
    %607 = vdwg.mxu0
    %608 = vmatprep.subr.bf16.mxu0 0
    %609 = vmatpush1.bf16.msra.mxu0 %v464
    %610 = vmatprep.subr.bf16.mxu0 0
    %611 = vmatpush1.bf16.msra.mxu0 %v465
    %612 = vmatprep.subr.bf16.mxu0 0
    %613 = vmatpush1.bf16.msra.mxu0 %v466
    %614 = vmatprep.subr.bf16.mxu0 0
    %615 = vmatpush1.bf16.msra.mxu0 %v467
    %616 = vmatprep.subr.bf16.mxu0 0
    %617 = vmatpush1.bf16.msra.mxu0 %v468
    %618 = vmatprep.subr.bf16.mxu0 0
    %619 = vmatpush1.bf16.msra.mxu0 %v469
    %620 = vmatprep.subr.bf16.mxu0 0
    %621 = vmatpush1.bf16.msra.mxu0 %v470
    %622 = vmatprep.subr.bf16.mxu0 0
    %623 = vmatpush1.bf16.msra.mxu0 %v471
    %624 = vmatprep.subr.bf16.mxu0 0
    %625 = vmatpush1.bf16.msra.mxu0 %v472
    %626 = vmatprep.subr.bf16.mxu0 0
    %627 = vmatpush1.bf16.msra.mxu0 %v473
    %628 = vmatprep.subr.bf16.mxu0 0
    %629 = vmatpush1.bf16.msra.mxu0 %v474
    %630 = vmatprep.subr.bf16.mxu0 0
    %631 = vmatpush1.bf16.msra.mxu0 %v475
    %632 = vmatprep.subr.bf16.mxu0 0
    %633 = vmatpush1.bf16.msra.mxu0 %v476
    %634 = vmatprep.subr.bf16.mxu0 0
    %635 = vmatpush1.bf16.msra.mxu0 %v477
    %636 = vmatprep.subr.bf16.mxu0 0
    %637 = vmatpush1.bf16.msra.mxu0 %v478
    %638 = vmatprep.subr.bf16.mxu0 0
    %639 = vmatpush1.bf16.msra.mxu0 %v479
    %640 = vmatprep.mubr.bf16.mxu0 %v231
    %641 = vmatmul.mubr.bf16.gmra.mrb[0].mxu0 %v217
    %v642 = vpop.f32.mrb[0].mxu0
    %v643 = vadd.f32 %v603, %v642
    %v644 = vpop.f32.mrb[0].mxu0
    %v645 = vpop.f32.mrb[0].mxu0
    %v646 = vpop.f32.mrb[0].mxu0
    %647 = vdwg.mxu0
    %v648 = vld [vmem:[%s4] sm:$0x1]
    %v650 = vlaneseq
    %v651 = vshrl.u32 %v650, 7
    %v652 = vsub.s32 0, %v651
    %v653 = vrot.slane %v648, %v652
    %v655 = vadd.f32 %v643, %v653
    %v656 = vmax.f32 %v655, 0.0
    %v657 = vld [vmem:[%s5] sm:$0xff]
    %v658 = vld [vmem:[%s5 + $0x8] sm:$0xff]
    %v659 = vld [vmem:[%s5 + $0x10] sm:$0xff]
    %v660 = vld [vmem:[%s5 + $0x18] sm:$0xff]
    %v661 = vld [vmem:[%s5 + $0x20] sm:$0xff]
    %v662 = vld [vmem:[%s5 + $0x28] sm:$0xff]
    %v663 = vld [vmem:[%s5 + $0x30] sm:$0xff]
    %v664 = vld [vmem:[%s5 + $0x38] sm:$0xff]
    %v665 = vld [vmem:[%s6] sm:$0x1]
    %v667 = vlaneseq
    %v668 = vshrl.u32 %v667, 7
    %v669 = vsub.s32 0, %v668
    %v670 = vrot.slane %v665, %v669
    %vm672 = vcmask 523264
    %v674 = vsel %vm672, %v656, 0
    %676 = vmatprep.subr.mxu0 0.0
    %677 = vmatpush1.msra.mxu0 %v657
    %678 = vmatprep.subr.mxu0 0.0
    %679 = vmatpush1.msra.mxu0 %v658
    %680 = vmatprep.subr.mxu0 0.0
    %681 = vmatpush1.msra.mxu0 %v659
    %682 = vmatprep.subr.mxu0 0.0
    %683 = vmatpush1.msra.mxu0 %v660
    %684 = vmatprep.subr.mxu0 0.0
    %685 = vmatpush1.msra.mxu0 %v661
    %686 = vmatprep.subr.mxu0 0.0
    %687 = vmatpush1.msra.mxu0 %v662
    %688 = vmatprep.subr.mxu0 0.0
    %689 = vmatpush1.msra.mxu0 %v663
    %690 = vmatprep.subr.mxu0 0.0
    %691 = vmatpush1.msra.mxu0 %v664
    %692 = vmatprep.subr.mxu0 0.0
    %693 = vmatpush1.msra.mxu0 0.0
    %694 = vmatprep.subr.mxu0 0.0
    %695 = vmatpush1.msra.mxu0 0.0
    %696 = vmatprep.subr.mxu0 0.0
    %697 = vmatpush1.msra.mxu0 0.0
    %698 = vmatprep.subr.mxu0 0.0
    %699 = vmatpush1.msra.mxu0 0.0
    %700 = vmatprep.subr.mxu0 0.0
    %701 = vmatpush1.msra.mxu0 0.0
    %702 = vmatprep.subr.mxu0 0.0
    %703 = vmatpush1.msra.mxu0 0.0
    %704 = vmatprep.subr.mxu0 0.0
    %705 = vmatpush1.msra.mxu0 0.0
    %706 = vmatprep.subr.mxu0 0.0
    %707 = vmatpush1.msra.mxu0 0.0
    %708 = vmatprep.subr.mxu0 0.0
    %709 = vmatpush1.msra.mxu0 0.0
    %710 = vmatprep.subr.mxu0 0.0
    %711 = vmatpush1.msra.mxu0 0.0
    %712 = vmatprep.subr.mxu0 0.0
    %713 = vmatpush1.msra.mxu0 0.0
    %714 = vmatprep.subr.mxu0 0.0
    %715 = vmatpush1.msra.mxu0 0.0
    %716 = vmatprep.subr.mxu0 0.0
    %717 = vmatpush1.msra.mxu0 0.0
    %718 = vmatprep.subr.mxu0 0.0
    %719 = vmatpush1.msra.mxu0 0.0
    %720 = vmatprep.subr.mxu0 0.0
    %721 = vmatpush1.msra.mxu0 0.0
    %722 = vmatprep.subr.mxu0 0.0
    %723 = vmatpush1.msra.mxu0 0.0
    %724 = vmatprep.subr.mxu0 0.0
    %725 = vmatpush1.msra.mxu0 0.0
    %726 = vmatprep.subr.mxu0 0.0
    %727 = vmatpush1.msra.mxu0 0.0
    %728 = vmatprep.subr.mxu0 0.0
    %729 = vmatpush1.msra.mxu0 0.0
    %730 = vmatprep.subr.mxu0 0.0
    %731 = vmatpush1.msra.mxu0 0.0
    %732 = vmatprep.subr.mxu0 0.0
    %733 = vmatpush1.msra.mxu0 0.0
    %734 = vmatprep.subr.mxu0 0.0
    %735 = vmatpush1.msra.mxu0 0.0
    %736 = vmatprep.subr.mxu0 0.0
    %737 = vmatpush1.msra.mxu0 0.0
    %738 = vmatprep.subr.mxu0 0.0
    %739 = vmatpush1.msra.mxu0 0.0
    %740 = vmatprep.mubr.f32.mxu0 0.0
    %741 = vmatmul.mubr.f32.gmra.mrb[0].mxu0 %v674
    %v742 = vpop.f32.mrb[0].mxu0
    %v743 = vadd.f32 %v670, %v742
    %v744 = vpop.f32.mrb[0].mxu0
    %745 = vdwg.mxu0
    %vm746 = vcmask 58368
    %747 = vst.msk [vmem:[#allocation2] sm:$0x3] %vm746, %v743
    // Predicated region
    $region30: #{tpu_custom_call.1} parent=1 // pred_check
      _
    $region31: #{tpu_custom_call.1} parent=1 // pred_check_branch
      %749 = sbr.rel (0) target = $region33
    $region32: #{tpu_custom_call.1} parent=1 // pred_region
      %s751 = ssub.s32 32, 32
      %752 = vsyncadd [#allocation3], %s751
      %s754 = sshll.u32 [#allocation2], 4
      %s755 = int_to_ptr.vmem [resolvable:$true] %s754
      %757 = dma.vmem_to_hbm [thread:$0]  %s755, 32, %s7, [#allocation3]
    $region33: #{tpu_custom_call.1} parent=1 // pred_fallthru
      _
    // Predicated region
    $region34: #{tpu_custom_call.1} parent=1 // pred_check
      _
    $region35: #{tpu_custom_call.1} parent=1 // pred_check_branch
      %759 = sbr.rel (0) target = $region37
    $region36: #{tpu_custom_call.1} parent=1 // pred_region
      %760 = dma.done [#allocation3], 32
    $region37: #{tpu_custom_call.1} parent=1 // pred_fallthru
      _
    %761 = vsyncpa [#allocation3], 1

</llo_original>
